<compile_context>
chip_gen: v6e
topology: v6e:2x2x1
jax: 0.10.0
libtpu: 0.0.40
codegen_flags: <defaults>
</compile_context>

<pallas_src>
import jax
import jax.numpy as jnp
from jax import lax
from jax.experimental import pallas as pl
from jax.experimental.pallas import tpu as pltpu


def _block_kernel(x_ref, up_ref, dn_ref, wdw_ref, s1_ref, b1_ref, wpw_ref,
                  s2_ref, b2_ref, out_ref, rowm_scr, rowp_scr):
    # x_ref   : (1, C, L)    L = TH*W flattened rows of this tile (lane axis)
    # up_ref  : (1, 1, C, W) image row just above the tile (zeros at top edge)
    # dn_ref  : (1, 1, C, W) image row just below the tile (zeros at bottom edge)
    # wdw_ref : (9, C, 1)    depthwise 3x3 weights, tap-major (k = 3*ky + kx)
    # s*/b*   : (C, 1)       fused (inference) BatchNorm scale / bias
    # wpw_ref : (C, C)       1x1 conv weights (C_out, C_in)
    # out_ref : (1, C, L)
    # row*_scr: (C, L)       VMEM scratch for the row-shifted, halo-spliced tile
    C = x_ref.shape[1]
    L = x_ref.shape[2]
    W = up_ref.shape[3]

    x = x_ref[0]                                            # (C, L) f32

    # Column-in-row index, used to mask the conv's zero padding along W.
    col = lax.broadcasted_iota(jnp.int32, (C, L), 1) % W
    at_left_edge = col == 0
    at_right_edge = col == (W - 1)

    def add_row_taps(acc, xr, ky):
        # Taps (ky, kx=0/1/2): left / centre / right neighbours along the lane
        # axis via XLU rolls + edge masks.  Weights broadcast per channel
        # (channel = sublane axis), so each tap is a single VPU FMA.
        left = jnp.where(at_left_edge, 0.0, pltpu.roll(xr, 1, axis=1))        # x-1
        right = jnp.where(at_right_edge, 0.0, pltpu.roll(xr, L - 1, axis=1))  # x+1
        acc = acc + wdw_ref[3 * ky + 0] * left
        acc = acc + wdw_ref[3 * ky + 1] * xr
        acc = acc + wdw_ref[3 * ky + 2] * right
        return acc

    # --- depthwise 3x3, padding=1 ---
    acc = add_row_taps(jnp.zeros((C, L), jnp.float32), x, 1)       # same row

    # ky = 0: values from row y-1 -> roll rows down one, splice in the top halo.
    rowm_scr[...] = pltpu.roll(x, W, axis=1)
    rowm_scr[:, 0:W] = up_ref[0, 0]
    acc = add_row_taps(acc, rowm_scr[...], 0)

    # ky = 2: values from row y+1 -> roll rows up one, splice the bottom halo.
    rowp_scr[...] = pltpu.roll(x, L - W, axis=1)
    rowp_scr[:, L - W:L] = dn_ref[0, 0]
    acc = add_row_taps(acc, rowp_scr[...], 2)

    # --- BN1 (fused, inference) + hardswish ---
    h = acc * s1_ref[...] + b1_ref[...]
    h = h * jnp.clip(h + 3.0, 0.0, 6.0) * (1.0 / 6.0)

    # --- 1x1 conv across channels (channels live on the sublane axis) ---
    if C < 128:
        # C broadcast-FMAs on the VPU; the MXU would be idle at K = N = C.
        h2 = wpw_ref[:, 0:1] * h[0:1, :]
        for ci in range(1, C):
            h2 = h2 + wpw_ref[:, ci:ci + 1] * h[ci:ci + 1, :]
    else:
        h2 = jnp.dot(wpw_ref[...], h, preferred_element_type=jnp.float32)

    # --- BN2 (fused) + hardswish ---
    h2 = h2 * s2_ref[...] + b2_ref[...]
    h2 = h2 * jnp.clip(h2 + 3.0, 0.0, 6.0) * (1.0 / 6.0)

    # Dropout2d: eval-mode identity.  Residual add from the aligned input tile.
    out_ref[0] = (h2 + x).astype(out_ref.dtype)


def _pick_row_tile(H, W, C, itemsize=4, target_bytes=2 * 1024 * 1024):
    """Rows per grid step: must divide H and keep the lane extent (TH*W) a
    multiple of 128 (dense, unmasked stores) while staying under a per-block
    VMEM budget; falls back to the whole image."""
    best = H
    for th in range(1, H):
        if H % th or (th * W) % 128:
            continue
        if th * W * C * itemsize > target_bytes:
            continue
        best = th
    return best


@jax.jit
def res_bn_hs_dr_block(x_nchw, w_dw, bn1, w_pw, bn2, eps=1e-5):
    """x_nchw: (N, C, H, W) float32. Returns (N, C, H, W). Inference semantics."""
    g1, be1, m1, v1 = bn1
    g2, be2, m2, v2 = bn2
    N, C, H, W = x_nchw.shape

    TH = _pick_row_tile(H, W, C)
    T = H // TH
    L = TH * W

    x = x_nchw.astype(jnp.float32)
    x_flat = x.reshape(N, C, H * W)          # free: H, W are contiguous in NCHW

    # Halo rows for every row tile (tiny: 2*T rows per image).  Zero rows at the
    # image top/bottom implement the conv's zero padding in H.
    zrow = jnp.zeros((N, C, 1, W), jnp.float32)
    up = jnp.concatenate([zrow, x[:, :, TH - 1:H - 1:TH, :]], axis=2)  # (N,C,T,W)
    dn = jnp.concatenate([x[:, :, TH:H:TH, :], zrow], axis=2)          # (N,C,T,W)
    up = jnp.transpose(up, (0, 2, 1, 3))     # (N,T,C,W) -- tiny, not full-tensor
    dn = jnp.transpose(dn, (0, 2, 1, 3))

    # Depthwise weights, tap-major: wdw9[3*ky+kx, c, 0] = w_dw[c, 0, ky, kx].
    wdw9 = jnp.transpose(w_dw[:, 0, :, :], (1, 2, 0)).reshape(9, C)[:, :, None]
    wpw2 = w_pw[:, :, 0, 0]                  # (C_out, C_in)

    # Fold BatchNorm (inference) into per-channel scale / bias, shape (C, 1).
    inv1 = g1 * lax.rsqrt(v1 + eps)
    inv2 = g2 * lax.rsqrt(v2 + eps)
    s1 = inv1.reshape(C, 1)
    b1 = (be1 - m1 * inv1).reshape(C, 1)
    s2 = inv2.reshape(C, 1)
    b2 = (be2 - m2 * inv2).reshape(C, 1)

    flops = N * C * H * W * (18 + 2 * C + 13)
    bytes_accessed = 4 * (2 * N * C * H * W + 2 * N * C * T * W
                          + 9 * C + C * C + 4 * C)

    out_flat = pl.pallas_call(
        _block_kernel,
        out_shape=jax.ShapeDtypeStruct((N, C, H * W), jnp.float32),
        grid_spec=pltpu.PrefetchScalarGridSpec(
            num_scalar_prefetch=0,
            grid=(N, T),
            in_specs=[
                pl.BlockSpec((1, C, L), lambda n, t: (n, 0, t)),
                pl.BlockSpec((1, 1, C, W), lambda n, t: (n, t, 0, 0)),
                pl.BlockSpec((1, 1, C, W), lambda n, t: (n, t, 0, 0)),
                pl.BlockSpec((9, C, 1), lambda n, t: (0, 0, 0)),
                pl.BlockSpec((C, 1), lambda n, t: (0, 0)),
                pl.BlockSpec((C, 1), lambda n, t: (0, 0)),
                pl.BlockSpec((C, C), lambda n, t: (0, 0)),
                pl.BlockSpec((C, 1), lambda n, t: (0, 0)),
                pl.BlockSpec((C, 1), lambda n, t: (0, 0)),
            ],
            out_specs=pl.BlockSpec((1, C, L), lambda n, t: (n, 0, t)),
            scratch_shapes=[pltpu.VMEM((C, L), jnp.float32),
                            pltpu.VMEM((C, L), jnp.float32)],
        ),
        compiler_params=pltpu.CompilerParams(
            dimension_semantics=("parallel", "parallel"),
            # explicit budget (v7x only has 64 MiB physical VMEM); tiles are tiny
            vmem_limit_bytes=32 * 1024 * 1024),
        cost_estimate=pl.CostEstimate(flops=flops, transcendentals=0,
                                      bytes_accessed=bytes_accessed),
    )(x_flat, up, dn, wdw9, s1, b1, wpw2, s2, b2)

    return out_flat.reshape(N, C, H, W)


def _hardswish(x):
    return x * jnp.clip(x + 3.0, 0.0, 6.0) / 6.0


def _ref_forward(x, w_dw, bn1, w_pw, bn2, eps=1e-5):
    """Pure-JAX NCHW reference matching the PyTorch module (eval mode)."""
    g1, be1, m1, v1 = bn1
    g2, be2, m2, v2 = bn2
    C = x.shape[1]
    dn = ("NCHW", "OIHW", "NCHW")
    y = lax.conv_general_dilated(x, w_dw, (1, 1), "SAME",
                                 dimension_numbers=dn, feature_group_count=C)
    y = ((y - m1[None, :, None, None]) / jnp.sqrt(v1 + eps)[None, :, None, None]
         * g1[None, :, None, None] + be1[None, :, None, None])
    y = _hardswish(y)
    y = lax.conv_general_dilated(y, w_pw, (1, 1), "VALID", dimension_numbers=dn)
    y = ((y - m2[None, :, None, None]) / jnp.sqrt(v2 + eps)[None, :, None, None]
         * g2[None, :, None, None] + be2[None, :, None, None])
    y = _hardswish(y)
    return y + x  # dropout is identity in eval


if __name__ == "__main__":
    N, C, H, W = 2, 4, 16, 16

    key = jax.random.PRNGKey(0)
    k_x, k_dw, k_pw, k_g1, k_b1, k_m1, k_v1, k_g2, k_b2, k_m2, k_v2 = (
        jax.random.split(key, 11))

    x = jax.random.normal(k_x, (N, C, H, W), jnp.float32)

    # Conv weights (PyTorch shapes): depthwise (C,1,3,3), pointwise (C,C,1,1).
    w_dw = 0.3 * jax.random.normal(k_dw, (C, 1, 3, 3), jnp.float32)
    w_pw = 0.3 * jax.random.normal(k_pw, (C, C, 1, 1), jnp.float32)

    # BatchNorm params (gamma, beta, running_mean, running_var).
    bn1 = (1.0 + 0.1 * jax.random.normal(k_g1, (C,), jnp.float32),
           0.1 * jax.random.normal(k_b1, (C,), jnp.float32),
           0.1 * jax.random.normal(k_m1, (C,), jnp.float32),
           1.0 + 0.1 * jax.random.uniform(k_v1, (C,), jnp.float32))
    bn2 = (1.0 + 0.1 * jax.random.normal(k_g2, (C,), jnp.float32),
           0.1 * jax.random.normal(k_b2, (C,), jnp.float32),
           0.1 * jax.random.normal(k_m2, (C,), jnp.float32),
           1.0 + 0.1 * jax.random.uniform(k_v2, (C,), jnp.float32))

    out = res_bn_hs_dr_block(x, w_dw, bn1, w_pw, bn2)
    out = jax.block_until_ready(out)

    ref = _ref_forward(x, w_dw, bn1, w_pw, bn2)
    assert out.shape == (N, C, H, W)
    assert jnp.allclose(out, ref, atol=1e-4, rtol=1e-4), (
        f"max err {jnp.max(jnp.abs(out - ref))}")

    print("KERNEL_OK")
</pallas_src>

<mosaic_0001>
module attributes {stable_mosaic.version = 11 : i64} {
  func.func @_block_kernel(%arg0: i32, %arg1: i32, %arg2: memref<1x4x128xf32, #tpu.memory_space<vmem>>, %arg3: memref<1x1x4x16xf32, #tpu.memory_space<vmem>>, %arg4: memref<1x1x4x16xf32, #tpu.memory_space<vmem>>, %arg5: memref<9x4x1xf32, #tpu.memory_space<vmem>>, %arg6: memref<4x1xf32, #tpu.memory_space<vmem>>, %arg7: memref<4x1xf32, #tpu.memory_space<vmem>>, %arg8: memref<4x4xf32, #tpu.memory_space<vmem>>, %arg9: memref<4x1xf32, #tpu.memory_space<vmem>>, %arg10: memref<4x1xf32, #tpu.memory_space<vmem>>, %arg11: memref<1x4x128xf32, #tpu.memory_space<vmem>>, %arg12: memref<4x128xf32, #tpu.memory_space<vmem>>, %arg13: memref<4x128xf32, #tpu.memory_space<vmem>>) attributes {dimension_semantics = [#tpu.dimension_semantics<parallel>, #tpu.dimension_semantics<parallel>], iteration_bounds = array<i64: 2, 2>, scalar_prefetch = 0 : i64, scratch_operands = 2 : i64, tpu.core_type = #tpu.core_type<tc>, window_params = [{transform_indices = @transform_0, window_bounds = array<i64: 1, 4, 128>}, {transform_indices = @transform_1, window_bounds = array<i64: 1, 1, 4, 16>}, {transform_indices = @transform_2, window_bounds = array<i64: 1, 1, 4, 16>}, {pipeline_mode = #tpu.pipeline_mode<synchronous>, transform_indices = @transform_3, window_bounds = array<i64: 9, 4, 1>}, {pipeline_mode = #tpu.pipeline_mode<synchronous>, transform_indices = @transform_4, window_bounds = array<i64: 4, 1>}, {pipeline_mode = #tpu.pipeline_mode<synchronous>, transform_indices = @transform_5, window_bounds = array<i64: 4, 1>}, {pipeline_mode = #tpu.pipeline_mode<synchronous>, transform_indices = @transform_6, window_bounds = array<i64: 4, 4>}, {pipeline_mode = #tpu.pipeline_mode<synchronous>, transform_indices = @transform_7, window_bounds = array<i64: 4, 1>}, {pipeline_mode = #tpu.pipeline_mode<synchronous>, transform_indices = @transform_8, window_bounds = array<i64: 4, 1>}, {transform_indices = @transform_9, window_bounds = array<i64: 1, 4, 128>}]} {
    %c0 = arith.constant 0 : index
    %c0_0 = arith.constant 0 : index
    %c0_1 = arith.constant 0 : index
    %0 = vector.load %arg2[%c0, %c0_0, %c0_1] : memref<1x4x128xf32, #tpu.memory_space<vmem>>, vector<1x4x128xf32>
    %1 = vector.shape_cast %0 : vector<1x4x128xf32> to vector<4x128xf32>
    %2 = tpu.iota {dimensions = array<i32: 1>} : vector<4x128xi32>
    %c16_i32 = arith.constant 16 : i32
    %c0_i32 = arith.constant 0 : i32
    %3 = arith.cmpi eq, %c16_i32, %c0_i32 : i32
    %c1_i32 = arith.constant 1 : i32
    %4 = arith.select %3, %c1_i32, %c16_i32 : i32
    %5 = vector.broadcast %4 : i32 to vector<4x128xi32>
    %6 = arith.remsi %2, %5 : vector<4x128xi32>
    %c0_i32_2 = arith.constant 0 : i32
    %7 = vector.broadcast %c0_i32_2 : i32 to vector<4x128xi32>
    %8 = arith.cmpi ne, %6, %7 : vector<4x128xi32>
    %c0_i32_3 = arith.constant 0 : i32
    %9 = vector.broadcast %c0_i32_3 : i32 to vector<4x128xi32>
    %10 = arith.cmpi slt, %6, %9 : vector<4x128xi32>
    %c0_i32_4 = arith.constant 0 : i32
    %11 = arith.cmpi slt, %4, %c0_i32_4 : i32
    %12 = vector.broadcast %11 : i1 to vector<4x128xi1>
    %13 = vector.broadcast %12 : vector<4x128xi1> to vector<4x128xi1>
    %14 = arith.xori %10, %13 : vector<4x128xi1>
    %15 = arith.andi %14, %8 : vector<4x128xi1>
    %16 = vector.broadcast %4 : i32 to vector<4x128xi32>
    %17 = arith.addi %6, %16 : vector<4x128xi32>
    %18 = arith.select %15, %17, %6 : vector<4x128xi1>, vector<4x128xi32>
    %c0_i32_5 = arith.constant 0 : i32
    %19 = vector.broadcast %c0_i32_5 : i32 to vector<4x128xi32>
    %20 = arith.cmpi eq, %18, %19 : vector<4x128xi32>
    %c15_i32 = arith.constant 15 : i32
    %21 = vector.broadcast %c15_i32 : i32 to vector<4x128xi32>
    %22 = arith.cmpi eq, %18, %21 : vector<4x128xi32>
    %cst = arith.constant 0.000000e+00 : f32
    %23 = vector.broadcast %cst : f32 to vector<4x128xf32>
    %c1_i32_6 = arith.constant 1 : i32
    %24 = tpu.dynamic_rotate %1 by %c1_i32_6 dim 1 : vector<4x128xf32>, i32 -> vector<4x128xf32>
    %cst_7 = arith.constant 0.000000e+00 : f32
    %25 = vector.broadcast %cst_7 : f32 to vector<4x128xf32>
    %26 = arith.select %20, %25, %24 : vector<4x128xi1>, vector<4x128xf32>
    %c127_i32 = arith.constant 127 : i32
    %27 = tpu.dynamic_rotate %1 by %c127_i32 dim 1 : vector<4x128xf32>, i32 -> vector<4x128xf32>
    %cst_8 = arith.constant 0.000000e+00 : f32
    %28 = vector.broadcast %cst_8 : f32 to vector<4x128xf32>
    %29 = arith.select %22, %28, %27 : vector<4x128xi1>, vector<4x128xf32>
    %c3 = arith.constant 3 : index
    %c0_9 = arith.constant 0 : index
    %c0_10 = arith.constant 0 : index
    %30 = vector.load %arg5[%c3, %c0_9, %c0_10] : memref<9x4x1xf32, #tpu.memory_space<vmem>>, vector<1x4x1xf32>
    %31 = vector.shape_cast %30 : vector<1x4x1xf32> to vector<4x1xf32>
    %32 = vector.broadcast %31 : vector<4x1xf32> to vector<4x128xf32>
    %33 = arith.mulf %32, %26 : vector<4x128xf32>
    %34 = arith.addf %23, %33 : vector<4x128xf32>
    %c4 = arith.constant 4 : index
    %c0_11 = arith.constant 0 : index
    %c0_12 = arith.constant 0 : index
    %35 = vector.load %arg5[%c4, %c0_11, %c0_12] : memref<9x4x1xf32, #tpu.memory_space<vmem>>, vector<1x4x1xf32>
    %36 = vector.shape_cast %35 : vector<1x4x1xf32> to vector<4x1xf32>
    %37 = vector.broadcast %36 : vector<4x1xf32> to vector<4x128xf32>
    %38 = arith.mulf %37, %1 : vector<4x128xf32>
    %39 = arith.addf %34, %38 : vector<4x128xf32>
    %c5 = arith.constant 5 : index
    %c0_13 = arith.constant 0 : index
    %c0_14 = arith.constant 0 : index
    %40 = vector.load %arg5[%c5, %c0_13, %c0_14] : memref<9x4x1xf32, #tpu.memory_space<vmem>>, vector<1x4x1xf32>
    %41 = vector.shape_cast %40 : vector<1x4x1xf32> to vector<4x1xf32>
    %42 = vector.broadcast %41 : vector<4x1xf32> to vector<4x128xf32>
    %43 = arith.mulf %42, %29 : vector<4x128xf32>
    %44 = arith.addf %39, %43 : vector<4x128xf32>
    %c16_i32_15 = arith.constant 16 : i32
    %45 = tpu.dynamic_rotate %1 by %c16_i32_15 dim 1 : vector<4x128xf32>, i32 -> vector<4x128xf32>
    %c0_16 = arith.constant 0 : index
    %c0_17 = arith.constant 0 : index
    %46 = vector.load %arg12[%c0_16, %c0_17] : memref<4x128xf32, #tpu.memory_space<vmem>>, vector<4x128xf32>
    tpu.vector_store %arg12[%c0_16, %c0_17], %45 {strides = array<i32>} : memref<4x128xf32, #tpu.memory_space<vmem>>, vector<4x128xf32>,
    %c0_18 = arith.constant 0 : index
    %c0_19 = arith.constant 0 : index
    %c0_20 = arith.constant 0 : index
    %c0_21 = arith.constant 0 : index
    %47 = vector.load %arg3[%c0_18, %c0_19, %c0_20, %c0_21] : memref<1x1x4x16xf32, #tpu.memory_space<vmem>>, vector<1x1x4x16xf32>
    %48 = vector.shape_cast %47 : vector<1x1x4x16xf32> to vector<4x16xf32>
    %c0_22 = arith.constant 0 : index
    %c0_23 = arith.constant 0 : index
    %49 = vector.load %arg12[%c0_22, %c0_23] : memref<4x128xf32, #tpu.memory_space<vmem>>, vector<4x16xf32>
    tpu.vector_store %arg12[%c0_22, %c0_23], %48 {strides = array<i32>} : memref<4x128xf32, #tpu.memory_space<vmem>>, vector<4x16xf32>,
    %c0_24 = arith.constant 0 : index
    %c0_25 = arith.constant 0 : index
    %50 = vector.load %arg12[%c0_24, %c0_25] : memref<4x128xf32, #tpu.memory_space<vmem>>, vector<4x128xf32>
    %c1_i32_26 = arith.constant 1 : i32
    %51 = tpu.dynamic_rotate %50 by %c1_i32_26 dim 1 : vector<4x128xf32>, i32 -> vector<4x128xf32>
    %cst_27 = arith.constant 0.000000e+00 : f32
    %52 = vector.broadcast %cst_27 : f32 to vector<4x128xf32>
    %53 = arith.select %20, %52, %51 : vector<4x128xi1>, vector<4x128xf32>
    %c127_i32_28 = arith.constant 127 : i32
    %54 = tpu.dynamic_rotate %50 by %c127_i32_28 dim 1 : vector<4x128xf32>, i32 -> vector<4x128xf32>
    %cst_29 = arith.constant 0.000000e+00 : f32
    %55 = vector.broadcast %cst_29 : f32 to vector<4x128xf32>
    %56 = arith.select %22, %55, %54 : vector<4x128xi1>, vector<4x128xf32>
    %c0_30 = arith.constant 0 : index
    %c0_31 = arith.constant 0 : index
    %c0_32 = arith.constant 0 : index
    %57 = vector.load %arg5[%c0_30, %c0_31, %c0_32] : memref<9x4x1xf32, #tpu.memory_space<vmem>>, vector<1x4x1xf32>
    %58 = vector.shape_cast %57 : vector<1x4x1xf32> to vector<4x1xf32>
    %59 = vector.broadcast %58 : vector<4x1xf32> to vector<4x128xf32>
    %60 = arith.mulf %59, %53 : vector<4x128xf32>
    %61 = arith.addf %44, %60 : vector<4x128xf32>
    %c1 = arith.constant 1 : index
    %c0_33 = arith.constant 0 : index
    %c0_34 = arith.constant 0 : index
    %62 = vector.load %arg5[%c1, %c0_33, %c0_34] : memref<9x4x1xf32, #tpu.memory_space<vmem>>, vector<1x4x1xf32>
    %63 = vector.shape_cast %62 : vector<1x4x1xf32> to vector<4x1xf32>
    %64 = vector.broadcast %63 : vector<4x1xf32> to vector<4x128xf32>
    %65 = arith.mulf %64, %50 : vector<4x128xf32>
    %66 = arith.addf %61, %65 : vector<4x128xf32>
    %c2 = arith.constant 2 : index
    %c0_35 = arith.constant 0 : index
    %c0_36 = arith.constant 0 : index
    %67 = vector.load %arg5[%c2, %c0_35, %c0_36] : memref<9x4x1xf32, #tpu.memory_space<vmem>>, vector<1x4x1xf32>
    %68 = vector.shape_cast %67 : vector<1x4x1xf32> to vector<4x1xf32>
    %69 = vector.broadcast %68 : vector<4x1xf32> to vector<4x128xf32>
    %70 = arith.mulf %69, %56 : vector<4x128xf32>
    %71 = arith.addf %66, %70 : vector<4x128xf32>
    %c112_i32 = arith.constant 112 : i32
    %72 = tpu.dynamic_rotate %1 by %c112_i32 dim 1 : vector<4x128xf32>, i32 -> vector<4x128xf32>
    %c0_37 = arith.constant 0 : index
    %c0_38 = arith.constant 0 : index
    %73 = vector.load %arg13[%c0_37, %c0_38] : memref<4x128xf32, #tpu.memory_space<vmem>>, vector<4x128xf32>
    tpu.vector_store %arg13[%c0_37, %c0_38], %72 {strides = array<i32>} : memref<4x128xf32, #tpu.memory_space<vmem>>, vector<4x128xf32>,
    %c0_39 = arith.constant 0 : index
    %c0_40 = arith.constant 0 : index
    %c0_41 = arith.constant 0 : index
    %c0_42 = arith.constant 0 : index
    %74 = vector.load %arg4[%c0_39, %c0_40, %c0_41, %c0_42] : memref<1x1x4x16xf32, #tpu.memory_space<vmem>>, vector<1x1x4x16xf32>
    %75 = vector.shape_cast %74 : vector<1x1x4x16xf32> to vector<4x16xf32>
    %c0_43 = arith.constant 0 : index
    %c112 = arith.constant 112 : index
    %76 = vector.load %arg13[%c0_43, %c112] : memref<4x128xf32, #tpu.memory_space<vmem>>, vector<4x16xf32>
    tpu.vector_store %arg13[%c0_43, %c112], %75 {strides = array<i32>} : memref<4x128xf32, #tpu.memory_space<vmem>>, vector<4x16xf32>,
    %c0_44 = arith.constant 0 : index
    %c0_45 = arith.constant 0 : index
    %77 = vector.load %arg13[%c0_44, %c0_45] : memref<4x128xf32, #tpu.memory_space<vmem>>, vector<4x128xf32>
    %c1_i32_46 = arith.constant 1 : i32
    %78 = tpu.dynamic_rotate %77 by %c1_i32_46 dim 1 : vector<4x128xf32>, i32 -> vector<4x128xf32>
    %cst_47 = arith.constant 0.000000e+00 : f32
    %79 = vector.broadcast %cst_47 : f32 to vector<4x128xf32>
    %80 = arith.select %20, %79, %78 : vector<4x128xi1>, vector<4x128xf32>
    %c127_i32_48 = arith.constant 127 : i32
    %81 = tpu.dynamic_rotate %77 by %c127_i32_48 dim 1 : vector<4x128xf32>, i32 -> vector<4x128xf32>
    %cst_49 = arith.constant 0.000000e+00 : f32
    %82 = vector.broadcast %cst_49 : f32 to vector<4x128xf32>
    %83 = arith.select %22, %82, %81 : vector<4x128xi1>, vector<4x128xf32>
    %c6 = arith.constant 6 : index
    %c0_50 = arith.constant 0 : index
    %c0_51 = arith.constant 0 : index
    %84 = vector.load %arg5[%c6, %c0_50, %c0_51] : memref<9x4x1xf32, #tpu.memory_space<vmem>>, vector<1x4x1xf32>
    %85 = vector.shape_cast %84 : vector<1x4x1xf32> to vector<4x1xf32>
    %86 = vector.broadcast %85 : vector<4x1xf32> to vector<4x128xf32>
    %87 = arith.mulf %86, %80 : vector<4x128xf32>
    %88 = arith.addf %71, %87 : vector<4x128xf32>
    %c7 = arith.constant 7 : index
    %c0_52 = arith.constant 0 : index
    %c0_53 = arith.constant 0 : index
    %89 = vector.load %arg5[%c7, %c0_52, %c0_53] : memref<9x4x1xf32, #tpu.memory_space<vmem>>, vector<1x4x1xf32>
    %90 = vector.shape_cast %89 : vector<1x4x1xf32> to vector<4x1xf32>
    %91 = vector.broadcast %90 : vector<4x1xf32> to vector<4x128xf32>
    %92 = arith.mulf %91, %77 : vector<4x128xf32>
    %93 = arith.addf %88, %92 : vector<4x128xf32>
    %c8 = arith.constant 8 : index
    %c0_54 = arith.constant 0 : index
    %c0_55 = arith.constant 0 : index
    %94 = vector.load %arg5[%c8, %c0_54, %c0_55] : memref<9x4x1xf32, #tpu.memory_space<vmem>>, vector<1x4x1xf32>
    %95 = vector.shape_cast %94 : vector<1x4x1xf32> to vector<4x1xf32>
    %96 = vector.broadcast %95 : vector<4x1xf32> to vector<4x128xf32>
    %97 = arith.mulf %96, %83 : vector<4x128xf32>
    %98 = arith.addf %93, %97 : vector<4x128xf32>
    %c0_56 = arith.constant 0 : index
    %c0_57 = arith.constant 0 : index
    %99 = vector.load %arg6[%c0_56, %c0_57] : memref<4x1xf32, #tpu.memory_space<vmem>>, vector<4x1xf32>
    %100 = vector.broadcast %99 : vector<4x1xf32> to vector<4x128xf32>
    %101 = arith.mulf %98, %100 : vector<4x128xf32>
    %c0_58 = arith.constant 0 : index
    %c0_59 = arith.constant 0 : index
    %102 = vector.load %arg7[%c0_58, %c0_59] : memref<4x1xf32, #tpu.memory_space<vmem>>, vector<4x1xf32>
    %103 = vector.broadcast %102 : vector<4x1xf32> to vector<4x128xf32>
    %104 = arith.addf %101, %103 : vector<4x128xf32>
    %cst_60 = arith.constant 3.000000e+00 : f32
    %105 = vector.broadcast %cst_60 : f32 to vector<4x128xf32>
    %106 = arith.addf %104, %105 : vector<4x128xf32>
    %cst_61 = arith.constant 0.000000e+00 : f32
    %cst_62 = arith.constant 6.000000e+00 : f32
    %107 = vector.broadcast %cst_61 : f32 to vector<4x128xf32>
    %108 = arith.maximumf %107, %106 : vector<4x128xf32>
    %109 = vector.broadcast %cst_62 : f32 to vector<4x128xf32>
    %110 = arith.minimumf %109, %108 : vector<4x128xf32>
    %111 = arith.mulf %104, %110 : vector<4x128xf32>
    %cst_63 = arith.constant 0.166666672 : f32
    %112 = vector.broadcast %cst_63 : f32 to vector<4x128xf32>
    %113 = arith.mulf %111, %112 : vector<4x128xf32>
    %c0_64 = arith.constant 0 : index
    %c0_65 = arith.constant 0 : index
    %114 = vector.load %arg8[%c0_64, %c0_65] : memref<4x4xf32, #tpu.memory_space<vmem>>, vector<4x1xf32>
    %115 = vector.extract_strided_slice %113 {offsets = [0, 0], sizes = [1, 128], strides = [1, 1]} : vector<4x128xf32> to vector<1x128xf32>
    %116 = vector.broadcast %114 : vector<4x1xf32> to vector<4x128xf32>
    %117 = vector.broadcast %115 : vector<1x128xf32> to vector<4x128xf32>
    %118 = arith.mulf %116, %117 : vector<4x128xf32>
    %c0_66 = arith.constant 0 : index
    %c1_67 = arith.constant 1 : index
    %119 = vector.load %arg8[%c0_66, %c1_67] : memref<4x4xf32, #tpu.memory_space<vmem>>, vector<4x1xf32>
    %120 = vector.extract_strided_slice %113 {offsets = [1, 0], sizes = [1, 128], strides = [1, 1]} : vector<4x128xf32> to vector<1x128xf32>
    %121 = vector.broadcast %119 : vector<4x1xf32> to vector<4x128xf32>
    %122 = vector.broadcast %120 : vector<1x128xf32> to vector<4x128xf32>
    %123 = arith.mulf %121, %122 : vector<4x128xf32>
    %124 = arith.addf %118, %123 : vector<4x128xf32>
    %c0_68 = arith.constant 0 : index
    %c2_69 = arith.constant 2 : index
    %125 = vector.load %arg8[%c0_68, %c2_69] : memref<4x4xf32, #tpu.memory_space<vmem>>, vector<4x1xf32>
    %126 = vector.extract_strided_slice %113 {offsets = [2, 0], sizes = [1, 128], strides = [1, 1]} : vector<4x128xf32> to vector<1x128xf32>
    %127 = vector.broadcast %125 : vector<4x1xf32> to vector<4x128xf32>
    %128 = vector.broadcast %126 : vector<1x128xf32> to vector<4x128xf32>
    %129 = arith.mulf %127, %128 : vector<4x128xf32>
    %130 = arith.addf %124, %129 : vector<4x128xf32>
    %c0_70 = arith.constant 0 : index
    %c3_71 = arith.constant 3 : index
    %131 = vector.load %arg8[%c0_70, %c3_71] : memref<4x4xf32, #tpu.memory_space<vmem>>, vector<4x1xf32>
    %132 = vector.extract_strided_slice %113 {offsets = [3, 0], sizes = [1, 128], strides = [1, 1]} : vector<4x128xf32> to vector<1x128xf32>
    %133 = vector.broadcast %131 : vector<4x1xf32> to vector<4x128xf32>
    %134 = vector.broadcast %132 : vector<1x128xf32> to vector<4x128xf32>
    %135 = arith.mulf %133, %134 : vector<4x128xf32>
    %136 = arith.addf %130, %135 : vector<4x128xf32>
    %c0_72 = arith.constant 0 : index
    %c0_73 = arith.constant 0 : index
    %137 = vector.load %arg9[%c0_72, %c0_73] : memref<4x1xf32, #tpu.memory_space<vmem>>, vector<4x1xf32>
    %138 = vector.broadcast %137 : vector<4x1xf32> to vector<4x128xf32>
    %139 = arith.mulf %136, %138 : vector<4x128xf32>
    %c0_74 = arith.constant 0 : index
    %c0_75 = arith.constant 0 : index
    %140 = vector.load %arg10[%c0_74, %c0_75] : memref<4x1xf32, #tpu.memory_space<vmem>>, vector<4x1xf32>
    %141 = vector.broadcast %140 : vector<4x1xf32> to vector<4x128xf32>
    %142 = arith.addf %139, %141 : vector<4x128xf32>
    %cst_76 = arith.constant 3.000000e+00 : f32
    %143 = vector.broadcast %cst_76 : f32 to vector<4x128xf32>
    %144 = arith.addf %142, %143 : vector<4x128xf32>
    %cst_77 = arith.constant 0.000000e+00 : f32
    %cst_78 = arith.constant 6.000000e+00 : f32
    %145 = vector.broadcast %cst_77 : f32 to vector<4x128xf32>
    %146 = arith.maximumf %145, %144 : vector<4x128xf32>
    %147 = vector.broadcast %cst_78 : f32 to vector<4x128xf32>
    %148 = arith.minimumf %147, %146 : vector<4x128xf32>
    %149 = arith.mulf %142, %148 : vector<4x128xf32>
    %cst_79 = arith.constant 0.166666672 : f32
    %150 = vector.broadcast %cst_79 : f32 to vector<4x128xf32>
    %151 = arith.mulf %149, %150 : vector<4x128xf32>
    %152 = arith.addf %151, %1 : vector<4x128xf32>
    %c0_80 = arith.constant 0 : index
    %c0_81 = arith.constant 0 : index
    %c0_82 = arith.constant 0 : index
    %153 = vector.load %arg11[%c0_80, %c0_81, %c0_82] : memref<1x4x128xf32, #tpu.memory_space<vmem>>, vector<1x4x128xf32>
    %154 = vector.shape_cast %153 : vector<1x4x128xf32> to vector<4x128xf32>
    %155 = vector.shape_cast %152 : vector<4x128xf32> to vector<1x4x128xf32>
    tpu.vector_store %arg11[%c0_80, %c0_81, %c0_82], %155 {strides = array<i32>} : memref<1x4x128xf32, #tpu.memory_space<vmem>>, vector<1x4x128xf32>,
    return
  }
  func.func @transform_0(%arg0: i32, %arg1: i32) -> (i32, i32, i32) {
    %c0_i32 = arith.constant 0 : i32
    %c0_i32_0 = arith.constant 0 : i32
    return %arg0, %c0_i32, %arg1 : i32, i32, i32
  }
  func.func @transform_1(%arg0: i32, %arg1: i32) -> (i32, i32, i32, i32) {
    %c0_i32 = arith.constant 0 : i32
    %c0_i32_0 = arith.constant 0 : i32
    %c0_i32_1 = arith.constant 0 : i32
    return %arg0, %arg1, %c0_i32, %c0_i32_0 : i32, i32, i32, i32
  }
  func.func @transform_2(%arg0: i32, %arg1: i32) -> (i32, i32, i32, i32) {
    %c0_i32 = arith.constant 0 : i32
    %c0_i32_0 = arith.constant 0 : i32
    %c0_i32_1 = arith.constant 0 : i32
    return %arg0, %arg1, %c0_i32, %c0_i32_0 : i32, i32, i32, i32
  }
  func.func @transform_3(%arg0: i32, %arg1: i32) -> (i32, i32, i32) {
    %c0_i32 = arith.constant 0 : i32
    %c0_i32_0 = arith.constant 0 : i32
    %c0_i32_1 = arith.constant 0 : i32
    %c0_i32_2 = arith.constant 0 : i32
    return %c0_i32, %c0_i32_0, %c0_i32_1 : i32, i32, i32
  }
  func.func @transform_4(%arg0: i32, %arg1: i32) -> (i32, i32) {
    %c0_i32 = arith.constant 0 : i32
    %c0_i32_0 = arith.constant 0 : i32
    %c0_i32_1 = arith.constant 0 : i32
    return %c0_i32, %c0_i32_0 : i32, i32
  }
  func.func @transform_5(%arg0: i32, %arg1: i32) -> (i32, i32) {
    %c0_i32 = arith.constant 0 : i32
    %c0_i32_0 = arith.constant 0 : i32
    %c0_i32_1 = arith.constant 0 : i32
    return %c0_i32, %c0_i32_0 : i32, i32
  }
  func.func @transform_6(%arg0: i32, %arg1: i32) -> (i32, i32) {
    %c0_i32 = arith.constant 0 : i32
    %c0_i32_0 = arith.constant 0 : i32
    %c0_i32_1 = arith.constant 0 : i32
    return %c0_i32, %c0_i32_0 : i32, i32
  }
  func.func @transform_7(%arg0: i32, %arg1: i32) -> (i32, i32) {
    %c0_i32 = arith.constant 0 : i32
    %c0_i32_0 = arith.constant 0 : i32
    %c0_i32_1 = arith.constant 0 : i32
    return %c0_i32, %c0_i32_0 : i32, i32
  }
  func.func @transform_8(%arg0: i32, %arg1: i32) -> (i32, i32) {
    %c0_i32 = arith.constant 0 : i32
    %c0_i32_0 = arith.constant 0 : i32
    %c0_i32_1 = arith.constant 0 : i32
    return %c0_i32, %c0_i32_0 : i32, i32
  }
  func.func @transform_9(%arg0: i32, %arg1: i32) -> (i32, i32, i32) {
    %c0_i32 = arith.constant 0 : i32
    %c0_i32_0 = arith.constant 0 : i32
    return %arg0, %c0_i32, %arg1 : i32, i32, i32
  }
}

</mosaic_0001>

<llo_original>
// kernel: res_bn_hs_dr_block.1
$region0: #{res_bn_hs_dr_block.1}
  #allocation0 [shape = 'u32[]', space=smem, size = 0x4, offset = 0x4, fixed_abs, tag = 'smem constant byte address 0x4 - core index']
  #allocation1 [shape = 'u32[144,128]{1,0:T(1,128)}', space=vmem, size = 0x12000, scoped, tag = 'internal scratch']
  #allocation2 [shape = 'f32[4,128]{1,0:T(4,128)}', space=vmem, size = 0x800, scoped, tag = 'scratch operand']
  #allocation3 [shape = 'f32[4,128]{1,0:T(4,128)}', space=vmem, size = 0x800, scoped, tag = 'scratch operand']
  %s0 = inlined_call_operand.vmem [shape: f32[2,4,256], index: 0, kind: input, shape index: {}]
  %s1 = inlined_call_operand.vmem [shape: f32[2,2,4,16], index: 1, kind: input, shape index: {}]
  %s2 = inlined_call_operand.vmem [shape: f32[2,2,4,16], index: 2, kind: input, shape index: {}]
  %s3 = inlined_call_operand.vmem [shape: f32[9,4,1], index: 3, kind: input, shape index: {}]
  %s4 = inlined_call_operand.vmem [shape: f32[4,1], index: 4, kind: input, shape index: {}]
  %s5 = inlined_call_operand.vmem [shape: f32[4,1], index: 5, kind: input, shape index: {}]
  %s6 = inlined_call_operand.vmem [shape: f32[4,4], index: 6, kind: input, shape index: {}]
  %s7 = inlined_call_operand.vmem [shape: f32[4,1], index: 7, kind: input, shape index: {}]
  %s8 = inlined_call_operand.vmem [shape: f32[4,1], index: 8, kind: input, shape index: {}]
  %s9 = inlined_call_operand.vmem [shape: f32[2,4,256], index: 9, kind: output, shape index: {}]
  %s10 = sld [smem:[#allocation0]]
  $region69: #{res_bn_hs_dr_block.1} parent=0
    _
  %s12 = ssub.s32 1, %s10
  %s13 = scalar_select 0, %s12, %s10
  loop: start=0, step=1, limit=6
  $region2: #{res_bn_hs_dr_block.1} parent=0 // loop_pre_header
    _
  $region3: #{res_bn_hs_dr_block.1} parent=0 // loop_header
    %s15 = sphi 0, %s19
    %p16 = scmp.ge.s32.totalorder %s15, 6
    %s22 = sphi 0, %s34
    %s23 = sphi 0, %s30
    %s24 = sphi 0, %s22
    %s25 = sphi 0, %s23
    %s26 = sphi 0, %s24
    %s27 = sphi 0, %s25
    %s39 = sphi 0, %s41
    %s42 = sphi 0, %s39
    %s43 = sphi 0, %s42
    %s59 = sphi 0, %s43
    %s67 = sphi 0, %s69
    %s70 = sphi 0, %s67
    %s71 = sphi 0, %s70
    %s87 = sphi 0, %s71
    %s95 = sphi 0, %s97
    %s98 = sphi 0, %s95
    %s99 = sphi 0, %s98
    %s115 = sphi 0, %s99
    %s119 = sphi 0, %s119
    %s121 = sphi 0, %s119
    %s122 = sphi 0, %s121
    %s136 = sphi 0, %s122
    %s140 = sphi 0, %s140
    %s142 = sphi 0, %s140
    %s143 = sphi 0, %s142
    %s157 = sphi 0, %s143
    %s161 = sphi 0, %s161
    %s163 = sphi 0, %s161
    %s164 = sphi 0, %s163
    %s178 = sphi 0, %s164
    %s182 = sphi 0, %s182
    %s184 = sphi 0, %s182
    %s185 = sphi 0, %s184
    %s199 = sphi 0, %s185
    %s203 = sphi 0, %s203
    %s205 = sphi 0, %s203
    %s206 = sphi 0, %s205
    %s220 = sphi 0, %s206
    %s224 = sphi 0, %s224
    %s226 = sphi 0, %s224
    %s227 = sphi 0, %s226
    %s241 = sphi 0, %s227
    %s249 = sphi 0, %s251
    %s252 = sphi 0, %s249
    %s253 = sphi 0, %s252
    %s269 = sphi 0, %s253
  $region4: #{res_bn_hs_dr_block.1} parent=0 // loop_header_branch
    %18 = sbr.rel (%p16) target = $region8
  $region5: #{res_bn_hs_dr_block.1} parent=0 // loop_body
    %s20 = ssub.s32 %s15, 1
    %s21 = ssub.s32 %s15, 2
    %s28 = sadd.s32 1, %s23
    %p29 = scmp.ge.s32.totalorder %s28, 2
    %s30 = scalar_select %p29, 0, %s28
    %s31 = sadd.s32 1, %s22
    %s32 = scalar_select %p29, %s31, %s22
    %p33 = scmp.ge.s32.totalorder %s32, 2
    %s34 = scalar_select %p33, 0, %s32
    %s35 = ssub.s32 %s22, %s34
    %s36 = ssub.s32 %s23, %s30
    %s37 = sor.u32 %s35, %s36
    %p38 = scmp.eq.s32.totalorder %s37, 0
    %s40 = sadd.s32 %s39, 1
    %s41 = scalar_select %p38, %s39, %s40
    %p44 = pneg %p38
    %p45 = scmp.eq.s32.totalorder %s15, 3
    %p46 = por %p44, %p45
    %p47 = scmp.ne.s32.totalorder %s39, %s42
    %p48 = scmp.eq.s32.totalorder %s15, 0
    %p49 = por %p47, %p48
    %p50 = scmp.ne.s32.totalorder %s39, %s42
    %p51 = scmp.eq.s32.totalorder %s20, 3
    %p52 = por %p50, %p51
    %p53 = scmp.ne.s32.totalorder %s42, %s43
    %p54 = scmp.eq.s32.totalorder %s20, 0
    %p55 = por %p53, %p54
    %p56 = scmp.ne.s32.totalorder %s42, %s43
    %p57 = scmp.eq.s32.totalorder %s21, 3
    %p58 = por %p56, %p57
    %p60 = scmp.ne.s32.totalorder %s43, %s59
    %p61 = scmp.eq.s32.totalorder %s21, 0
    %p62 = por %p60, %p61
    %s63 = ssub.s32 %s22, %s34
    %s64 = ssub.s32 %s23, %s30
    %s65 = sor.u32 %s63, %s64
    %p66 = scmp.eq.s32.totalorder %s65, 0
    %s68 = sadd.s32 %s67, 1
    %s69 = scalar_select %p66, %s67, %s68
    %p72 = pneg %p66
    %p73 = scmp.eq.s32.totalorder %s15, 3
    %p74 = por %p72, %p73
    %p75 = scmp.ne.s32.totalorder %s67, %s70
    %p76 = scmp.eq.s32.totalorder %s15, 0
    %p77 = por %p75, %p76
    %p78 = scmp.ne.s32.totalorder %s67, %s70
    %p79 = scmp.eq.s32.totalorder %s20, 3
    %p80 = por %p78, %p79
    %p81 = scmp.ne.s32.totalorder %s70, %s71
    %p82 = scmp.eq.s32.totalorder %s20, 0
    %p83 = por %p81, %p82
    %p84 = scmp.ne.s32.totalorder %s70, %s71
    %p85 = scmp.eq.s32.totalorder %s21, 3
    %p86 = por %p84, %p85
    %p88 = scmp.ne.s32.totalorder %s71, %s87
    %p89 = scmp.eq.s32.totalorder %s21, 0
    %p90 = por %p88, %p89
    %s91 = ssub.s32 %s22, %s34
    %s92 = ssub.s32 %s23, %s30
    %s93 = sor.u32 %s91, %s92
    %p94 = scmp.eq.s32.totalorder %s93, 0
    %s96 = sadd.s32 %s95, 1
    %s97 = scalar_select %p94, %s95, %s96
    %p100 = pneg %p94
    %p101 = scmp.eq.s32.totalorder %s15, 3
    %p102 = por %p100, %p101
    %p103 = scmp.ne.s32.totalorder %s95, %s98
    %p104 = scmp.eq.s32.totalorder %s15, 0
    %p105 = por %p103, %p104
    %p106 = scmp.ne.s32.totalorder %s95, %s98
    %p107 = scmp.eq.s32.totalorder %s20, 3
    %p108 = por %p106, %p107
    %p109 = scmp.ne.s32.totalorder %s98, %s99
    %p110 = scmp.eq.s32.totalorder %s20, 0
    %p111 = por %p109, %p110
    %p112 = scmp.ne.s32.totalorder %s98, %s99
    %p113 = scmp.eq.s32.totalorder %s21, 3
    %p114 = por %p112, %p113
    %p116 = scmp.ne.s32.totalorder %s99, %s115
    %p117 = scmp.eq.s32.totalorder %s21, 0
    %p118 = por %p116, %p117
    %s120 = sadd.s32 %s119, 1
    %p123 = scmp.eq.s32.totalorder %s15, 3
    %p124 = scmp.ne.s32.totalorder %s119, %s121
    %p125 = scmp.eq.s32.totalorder %s15, 0
    %p126 = por %p124, %p125
    %p127 = scmp.ne.s32.totalorder %s119, %s121
    %p128 = scmp.eq.s32.totalorder %s20, 3
    %p129 = por %p127, %p128
    %p130 = scmp.ne.s32.totalorder %s121, %s122
    %p131 = scmp.eq.s32.totalorder %s20, 0
    %p132 = por %p130, %p131
    %p133 = scmp.ne.s32.totalorder %s121, %s122
    %p134 = scmp.eq.s32.totalorder %s21, 3
    %p135 = por %p133, %p134
    %p137 = scmp.ne.s32.totalorder %s122, %s136
    %p138 = scmp.eq.s32.totalorder %s21, 0
    %p139 = por %p137, %p138
    %s141 = sadd.s32 %s140, 1
    %p144 = scmp.eq.s32.totalorder %s15, 3
    %p145 = scmp.ne.s32.totalorder %s140, %s142
    %p146 = scmp.eq.s32.totalorder %s15, 0
    %p147 = por %p145, %p146
    %p148 = scmp.ne.s32.totalorder %s140, %s142
    %p149 = scmp.eq.s32.totalorder %s20, 3
    %p150 = por %p148, %p149
    %p151 = scmp.ne.s32.totalorder %s142, %s143
    %p152 = scmp.eq.s32.totalorder %s20, 0
    %p153 = por %p151, %p152
    %p154 = scmp.ne.s32.totalorder %s142, %s143
    %p155 = scmp.eq.s32.totalorder %s21, 3
    %p156 = por %p154, %p155
    %p158 = scmp.ne.s32.totalorder %s143, %s157
    %p159 = scmp.eq.s32.totalorder %s21, 0
    %p160 = por %p158, %p159
    %s162 = sadd.s32 %s161, 1
    %p165 = scmp.eq.s32.totalorder %s15, 3
    %p166 = scmp.ne.s32.totalorder %s161, %s163
    %p167 = scmp.eq.s32.totalorder %s15, 0
    %p168 = por %p166, %p167
    %p169 = scmp.ne.s32.totalorder %s161, %s163
    %p170 = scmp.eq.s32.totalorder %s20, 3
    %p171 = por %p169, %p170
    %p172 = scmp.ne.s32.totalorder %s163, %s164
    %p173 = scmp.eq.s32.totalorder %s20, 0
    %p174 = por %p172, %p173
    %p175 = scmp.ne.s32.totalorder %s163, %s164
    %p176 = scmp.eq.s32.totalorder %s21, 3
    %p177 = por %p175, %p176
    %p179 = scmp.ne.s32.totalorder %s164, %s178
    %p180 = scmp.eq.s32.totalorder %s21, 0
    %p181 = por %p179, %p180
    %s183 = sadd.s32 %s182, 1
    %p186 = scmp.eq.s32.totalorder %s15, 3
    %p187 = scmp.ne.s32.totalorder %s182, %s184
    %p188 = scmp.eq.s32.totalorder %s15, 0
    %p189 = por %p187, %p188
    %p190 = scmp.ne.s32.totalorder %s182, %s184
    %p191 = scmp.eq.s32.totalorder %s20, 3
    %p192 = por %p190, %p191
    %p193 = scmp.ne.s32.totalorder %s184, %s185
    %p194 = scmp.eq.s32.totalorder %s20, 0
    %p195 = por %p193, %p194
    %p196 = scmp.ne.s32.totalorder %s184, %s185
    %p197 = scmp.eq.s32.totalorder %s21, 3
    %p198 = por %p196, %p197
    %p200 = scmp.ne.s32.totalorder %s185, %s199
    %p201 = scmp.eq.s32.totalorder %s21, 0
    %p202 = por %p200, %p201
    %s204 = sadd.s32 %s203, 1
    %p207 = scmp.eq.s32.totalorder %s15, 3
    %p208 = scmp.ne.s32.totalorder %s203, %s205
    %p209 = scmp.eq.s32.totalorder %s15, 0
    %p210 = por %p208, %p209
    %p211 = scmp.ne.s32.totalorder %s203, %s205
    %p212 = scmp.eq.s32.totalorder %s20, 3
    %p213 = por %p211, %p212
    %p214 = scmp.ne.s32.totalorder %s205, %s206
    %p215 = scmp.eq.s32.totalorder %s20, 0
    %p216 = por %p214, %p215
    %p217 = scmp.ne.s32.totalorder %s205, %s206
    %p218 = scmp.eq.s32.totalorder %s21, 3
    %p219 = por %p217, %p218
    %p221 = scmp.ne.s32.totalorder %s206, %s220
    %p222 = scmp.eq.s32.totalorder %s21, 0
    %p223 = por %p221, %p222
    %s225 = sadd.s32 %s224, 1
    %p228 = scmp.eq.s32.totalorder %s15, 3
    %p229 = scmp.ne.s32.totalorder %s224, %s226
    %p230 = scmp.eq.s32.totalorder %s15, 0
    %p231 = por %p229, %p230
    %p232 = scmp.ne.s32.totalorder %s224, %s226
    %p233 = scmp.eq.s32.totalorder %s20, 3
    %p234 = por %p232, %p233
    %p235 = scmp.ne.s32.totalorder %s226, %s227
    %p236 = scmp.eq.s32.totalorder %s20, 0
    %p237 = por %p235, %p236
    %p238 = scmp.ne.s32.totalorder %s226, %s227
    %p239 = scmp.eq.s32.totalorder %s21, 3
    %p240 = por %p238, %p239
    %p242 = scmp.ne.s32.totalorder %s227, %s241
    %p243 = scmp.eq.s32.totalorder %s21, 0
    %p244 = por %p242, %p243
    %s245 = ssub.s32 %s22, %s34
    %s246 = ssub.s32 %s23, %s30
    %s247 = sor.u32 %s245, %s246
    %p248 = scmp.eq.s32.totalorder %s247, 0
    %s250 = sadd.s32 %s249, 1
    %s251 = scalar_select %p248, %s249, %s250
    %p254 = pneg %p248
    %p255 = scmp.eq.s32.totalorder %s15, 3
    %p256 = por %p254, %p255
    %p257 = scmp.ne.s32.totalorder %s249, %s252
    %p258 = scmp.eq.s32.totalorder %s15, 0
    %p259 = por %p257, %p258
    %p260 = scmp.ne.s32.totalorder %s249, %s252
    %p261 = scmp.eq.s32.totalorder %s20, 3
    %p262 = por %p260, %p261
    %p263 = scmp.ne.s32.totalorder %s252, %s253
    %p264 = scmp.eq.s32.totalorder %s20, 0
    %p265 = por %p263, %p264
    %p266 = scmp.ne.s32.totalorder %s252, %s253
    %p267 = scmp.eq.s32.totalorder %s21, 3
    %p268 = por %p266, %p267
    %p270 = scmp.ne.s32.totalorder %s253, %s269
    %p271 = scmp.eq.s32.totalorder %s21, 0
    %p272 = por %p270, %p271
    %p273 = scmp.le.s32.totalorder 1, %s15
    %p274 = scmp.lt.s32.totalorder %s15, 5
    %p275 = pnand %p273, %p274
    %p276 = pneg %p275
    // Predicated region
    $region9: #{res_bn_hs_dr_block.1} parent=5 // pred_check
      _
    $region10: #{res_bn_hs_dr_block.1} parent=5 // pred_check_branch
      %278 = sbr.rel (%p275) target = $region12
    $region11: #{res_bn_hs_dr_block.1} parent=5 // pred_region
      %s279 = ssub.s32 %s15, 1
      // Predicated region
      $region13: #{res_bn_hs_dr_block.1} parent=11 // pred_check
        %p280 = pneg %p132
      $region14: #{res_bn_hs_dr_block.1} parent=11 // pred_check_branch
        %282 = sbr.rel (%p280) target = $region16
      $region15: #{res_bn_hs_dr_block.1} parent=11 // pred_region
        _
      $region16: #{res_bn_hs_dr_block.1} parent=11 // pred_fallthru
        _
      // Predicated region
      $region17: #{res_bn_hs_dr_block.1} parent=11 // pred_check
        %p283 = pneg %p153
      $region18: #{res_bn_hs_dr_block.1} parent=11 // pred_check_branch
        %285 = sbr.rel (%p283) target = $region20
      $region19: #{res_bn_hs_dr_block.1} parent=11 // pred_region
        _
      $region20: #{res_bn_hs_dr_block.1} parent=11 // pred_fallthru
        _
      // Predicated region
      $region21: #{res_bn_hs_dr_block.1} parent=11 // pred_check
        %p286 = pneg %p174
      $region22: #{res_bn_hs_dr_block.1} parent=11 // pred_check_branch
        %288 = sbr.rel (%p286) target = $region24
      $region23: #{res_bn_hs_dr_block.1} parent=11 // pred_region
        _
      $region24: #{res_bn_hs_dr_block.1} parent=11 // pred_fallthru
        _
      // Predicated region
      $region25: #{res_bn_hs_dr_block.1} parent=11 // pred_check
        %p289 = pneg %p195
      $region26: #{res_bn_hs_dr_block.1} parent=11 // pred_check_branch
        %291 = sbr.rel (%p289) target = $region28
      $region27: #{res_bn_hs_dr_block.1} parent=11 // pred_region
        _
      $region28: #{res_bn_hs_dr_block.1} parent=11 // pred_fallthru
        _
      // Predicated region
      $region29: #{res_bn_hs_dr_block.1} parent=11 // pred_check
        %p292 = pneg %p216
      $region30: #{res_bn_hs_dr_block.1} parent=11 // pred_check_branch
        %294 = sbr.rel (%p292) target = $region32
      $region31: #{res_bn_hs_dr_block.1} parent=11 // pred_region
        _
      $region32: #{res_bn_hs_dr_block.1} parent=11 // pred_fallthru
        _
      // Predicated region
      $region33: #{res_bn_hs_dr_block.1} parent=11 // pred_check
        %p295 = pneg %p237
      $region34: #{res_bn_hs_dr_block.1} parent=11 // pred_check_branch
        %297 = sbr.rel (%p295) target = $region36
      $region35: #{res_bn_hs_dr_block.1} parent=11 // pred_region
        _
      $region36: #{res_bn_hs_dr_block.1} parent=11 // pred_fallthru
        _
    $region12: #{res_bn_hs_dr_block.1} parent=5 // pred_fallthru
      _
    %p298 = scmp.lt.s32.totalorder %s15, 4
    // Predicated region
    $region37: #{res_bn_hs_dr_block.1} parent=5 // pred_check
      %p299 = pneg %p298
    $region38: #{res_bn_hs_dr_block.1} parent=5 // pred_check_branch
      %301 = sbr.rel (%p299) target = $region40
    $region39: #{res_bn_hs_dr_block.1} parent=5 // pred_region
      // Predicated region
      $region41: #{res_bn_hs_dr_block.1} parent=39 // pred_check
        %p302 = pneg %p49
      $region42: #{res_bn_hs_dr_block.1} parent=39 // pred_check_branch
        %304 = sbr.rel (%p302) target = $region44
      $region43: #{res_bn_hs_dr_block.1} parent=39 // pred_region
        %p305 = scmp.lt.s32.totalorder %s22, 1
        %s306 = scalar_select %p305, %s22, 1
        %p307 = scmp.lt.s32.totalorder %s23, 1
        %s308 = scalar_select %p307, %s23, 1
        %s309 = smul.addr %s306, 2
        %s310 = sadd.s32 %s308, %s309
        %s311 = smul.addr %s310, 4
        %s312 = scalar_lea.vmem %s0, %s311
      $region44: #{res_bn_hs_dr_block.1} parent=39 // pred_fallthru
        _
      // Predicated region
      $region45: #{res_bn_hs_dr_block.1} parent=39 // pred_check
        %p313 = pneg %p77
      $region46: #{res_bn_hs_dr_block.1} parent=39 // pred_check_branch
        %315 = sbr.rel (%p313) target = $region48
      $region47: #{res_bn_hs_dr_block.1} parent=39 // pred_region
        %p316 = scmp.lt.s32.totalorder %s22, 1
        %s317 = scalar_select %p316, %s22, 1
        %p318 = scmp.lt.s32.totalorder %s23, 1
        %s319 = scalar_select %p318, %s23, 1
        %s320 = smul.addr %s317, 2
        %s321 = sadd.s32 %s319, %s320
        %s322 = smul.addr %s321, 4
        %s323 = scalar_lea.vmem %s1, %s322
      $region48: #{res_bn_hs_dr_block.1} parent=39 // pred_fallthru
        _
      // Predicated region
      $region49: #{res_bn_hs_dr_block.1} parent=39 // pred_check
        %p324 = pneg %p105
      $region50: #{res_bn_hs_dr_block.1} parent=39 // pred_check_branch
        %326 = sbr.rel (%p324) target = $region52
      $region51: #{res_bn_hs_dr_block.1} parent=39 // pred_region
        %p327 = scmp.lt.s32.totalorder %s22, 1
        %s328 = scalar_select %p327, %s22, 1
        %p329 = scmp.lt.s32.totalorder %s23, 1
        %s330 = scalar_select %p329, %s23, 1
        %s331 = smul.addr %s328, 2
        %s332 = sadd.s32 %s330, %s331
        %s333 = smul.addr %s332, 4
        %s334 = scalar_lea.vmem %s2, %s333
      $region52: #{res_bn_hs_dr_block.1} parent=39 // pred_fallthru
        _
    $region40: #{res_bn_hs_dr_block.1} parent=5 // pred_fallthru
      _
    %p335 = scmp.le.s32.totalorder 1, %s15
    %p336 = scmp.lt.s32.totalorder %s15, 5
    %p337 = pnand %p335, %p336
    %p338 = pneg %p337
    // Predicated region
    $region53: #{res_bn_hs_dr_block.1} parent=5 // pred_check
      _
    $region54: #{res_bn_hs_dr_block.1} parent=5 // pred_check_branch
      %340 = sbr.rel (%p337) target = $region56
    $region55: #{res_bn_hs_dr_block.1} parent=5 // pred_region
      %s341 = ssub.s32 %s15, 1
      %p342 = scmp.lt.s32.totalorder %s24, 1
      %s343 = scalar_select %p342, %s24, 1
      %p344 = scmp.lt.s32.totalorder %s25, 1
      %s345 = scalar_select %p344, %s25, 1
      %s346 = smul.addr %s343, 2
      %s347 = sadd.s32 %s345, %s346
      %s348 = smul.addr %s347, 4
      %s349 = scalar_lea.vmem %s0, %s348
      %p350 = pneg %p55
      %p351 = pneg %p52
      %p352 = scmp.lt.s32.totalorder %s24, 1
      %s353 = scalar_select %p352, %s24, 1
      %p354 = scmp.lt.s32.totalorder %s25, 1
      %s355 = scalar_select %p354, %s25, 1
      %s356 = smul.addr %s353, 2
      %s357 = sadd.s32 %s355, %s356
      %s358 = smul.addr %s357, 4
      %s359 = scalar_lea.vmem %s1, %s358
      %p360 = pneg %p83
      %p361 = pneg %p80
      %p362 = scmp.lt.s32.totalorder %s24, 1
      %s363 = scalar_select %p362, %s24, 1
      %p364 = scmp.lt.s32.totalorder %s25, 1
      %s365 = scalar_select %p364, %s25, 1
      %s366 = smul.addr %s363, 2
      %s367 = sadd.s32 %s365, %s366
      %s368 = smul.addr %s367, 4
      %s369 = scalar_lea.vmem %s2, %s368
      %p370 = pneg %p111
      %p371 = pneg %p108
      %p372 = pneg %p132
      %p373 = pneg %p129
      %p374 = pneg %p153
      %p375 = pneg %p150
      %p376 = pneg %p174
      %p377 = pneg %p171
      %p378 = pneg %p195
      %p379 = pneg %p192
      %p380 = pneg %p216
      %p381 = pneg %p213
      %p382 = pneg %p237
      %p383 = pneg %p234
      %p384 = pneg %p265
      %p385 = pneg %p262
      %p386 = scmp.lt.s32.totalorder %s24, 1
      %s387 = scalar_select %p386, %s24, 1
      %p388 = scmp.lt.s32.totalorder %s25, 1
      %s389 = scalar_select %p388, %s25, 1
      %s390 = smul.addr %s387, 2
      %s391 = sadd.s32 %s389, %s390
      %s392 = smul.addr %s391, 4
      %s393 = scalar_lea.vmem %s9, %s392
      %p394 = scmp.lt.s32.totalorder %s24, 1
      %s395 = scalar_select %p394, %s24, 1
      %p396 = scmp.lt.s32.totalorder %s25, 1
      %s397 = scalar_select %p396, %s25, 1
      %s398 = smul.addr %s395, 2
      %s399 = sadd.s32 %s397, %s398
      %s400 = smul.addr %s399, 4
      %s401 = scalar_lea.vmem %s0, %s400
      %p402 = scmp.lt.s32.totalorder %s24, 1
      %s403 = scalar_select %p402, %s24, 1
      %p404 = scmp.lt.s32.totalorder %s25, 1
      %s405 = scalar_select %p404, %s25, 1
      %s406 = smul.addr %s403, 2
      %s407 = sadd.s32 %s405, %s406
      %s408 = smul.addr %s407, 4
      %s409 = scalar_lea.vmem %s1, %s408
      %p410 = scmp.lt.s32.totalorder %s24, 1
      %s411 = scalar_select %p410, %s24, 1
      %p412 = scmp.lt.s32.totalorder %s25, 1
      %s413 = scalar_select %p412, %s25, 1
      %s414 = smul.addr %s411, 2
      %s415 = sadd.s32 %s413, %s414
      %s416 = smul.addr %s415, 4
      %s417 = scalar_lea.vmem %s2, %s416
      %p418 = scmp.lt.s32.totalorder %s24, 1
      %s419 = scalar_select %p418, %s24, 1
      %p420 = scmp.lt.s32.totalorder %s25, 1
      %s421 = scalar_select %p420, %s25, 1
      %s422 = smul.addr %s419, 2
      %s423 = sadd.s32 %s421, %s422
      %s424 = smul.addr %s423, 4
      %s425 = scalar_lea.vmem %s9, %s424
      %v426 = vld [vmem:[%s401] sm:$0xf]
      %v427 = vlaneseq
      %v428 = vand.u32 %v427, 127
      %vm429 = vcmp.lt.s32.totalorder %v428, 0
      %v430 = vsub.s32 0, %v428
      %v431 = vsel %vm429, %v430, %v428
      %v432 = vshrl.u32 %v431, 4
      %v433 = vand.u32 %v431, 15
      %v434 = vsub.s32 0, %v433
      %v435 = vsel %vm429, %v434, %v433
      %vm436 = vcmp.ne.s32.totalorder %v435, 0
      %vm437 = vcmp.lt.s32.totalorder %v435, 0
      %vm438 = vmand %vm437, %vm436
      %v439 = vadd.s32 %v435, 16
      %v440 = vsel %vm438, %v439, %v435
      %vm441 = vcmp.eq.s32.totalorder %v440, 0
      %vm442 = vcmp.eq.s32.totalorder %v440, 15
      %443 = vrot.lane.b32.xlu0 %v426, 1
      %v444 = vpop.permute.xlu0 %443
      %v445 = vsel %vm441, 0.0, %v444
      %446 = vrot.lane.b32.xlu0 %v426, 127
      %v447 = vpop.permute.xlu0 %446
      %v448 = vsel %vm442, 0.0, %v447
      %s449 = scalar_lea.vmem %s3, 12
      %v450 = vld [vmem:[%s449] sm:$0xf]
      %452 = vset.pattern.permute.xlu0 0
      %453 = vperm.xlu0 %452, %v450
      %v454 = vpop.permute.xlu0 %453
      %v456 = vmul.f32 %v454, %v445
      %v457 = vadd.f32 %v456, 0.0
      %s458 = scalar_lea.vmem %s3, 16
      %v459 = vld [vmem:[%s458] sm:$0xf]
      %461 = vset.pattern.permute.xlu0 0
      %462 = vperm.xlu0 %461, %v459
      %v463 = vpop.permute.xlu0 %462
      %v465 = vmul.f32 %v463, %v426
      %v466 = vadd.f32 %v457, %v465
      %s467 = scalar_lea.vmem %s3, 20
      %v468 = vld [vmem:[%s467] sm:$0xf]
      %470 = vset.pattern.permute.xlu0 0
      %471 = vperm.xlu0 %470, %v468
      %v472 = vpop.permute.xlu0 %471
      %v474 = vmul.f32 %v472, %v448
      %v475 = vadd.f32 %v466, %v474
      %476 = vrot.lane.b32.xlu0 %v426, 16
      %v477 = vpop.permute.xlu0 %476
      %478 = vst [vmem:[#allocation2] sm:$0xf] %v477
      %v479 = vld [vmem:[%s409] sm:$0xf]
      %vm480 = vcmask 125952
      %481 = vst.msk [vmem:[#allocation2] sm:$0xf] %vm480, %v479
      %v482 = vld [vmem:[#allocation2] sm:$0xf]
      %483 = vrot.lane.b32.xlu0 %v482, 1
      %v484 = vpop.permute.xlu0 %483
      %v485 = vsel %vm441, 0.0, %v484
      %486 = vrot.lane.b32.xlu0 %v482, 127
      %v487 = vpop.permute.xlu0 %486
      %v488 = vsel %vm442, 0.0, %v487
      %v489 = vld [vmem:[%s3] sm:$0xf]
      %491 = vset.pattern.permute.xlu0 0
      %492 = vperm.xlu0 %491, %v489
      %v493 = vpop.permute.xlu0 %492
      %v495 = vmul.f32 %v493, %v485
      %v496 = vadd.f32 %v475, %v495
      %s497 = scalar_lea.vmem %s3, 4
      %v498 = vld [vmem:[%s497] sm:$0xf]
      %500 = vset.pattern.permute.xlu0 0
      %501 = vperm.xlu0 %500, %v498
      %v502 = vpop.permute.xlu0 %501
      %v504 = vmul.f32 %v502, %v482
      %v505 = vadd.f32 %v496, %v504
      %s506 = scalar_lea.vmem %s3, 8
      %v507 = vld [vmem:[%s506] sm:$0xf]
      %509 = vset.pattern.permute.xlu0 0
      %510 = vperm.xlu0 %509, %v507
      %v511 = vpop.permute.xlu0 %510
      %v513 = vmul.f32 %v511, %v488
      %v514 = vadd.f32 %v505, %v513
      %515 = vrot.lane.b32.xlu0 %v426, 112
      %v516 = vpop.permute.xlu0 %515
      %517 = vst [vmem:[#allocation3] sm:$0xf] %v516
      %v518 = vld [vmem:[%s417] sm:$0xf]
      %520 = vrot.lane.b32.xlu0 %v518, 112
      %v521 = vpop.permute.xlu0 %520
      %vm523 = vcmask 1044352
      %524 = vst.msk [vmem:[#allocation3] sm:$0xf] %vm523, %v521
      %v525 = vld [vmem:[#allocation3] sm:$0xf]
      %526 = vrot.lane.b32.xlu0 %v525, 1
      %v527 = vpop.permute.xlu0 %526
      %v528 = vsel %vm441, 0.0, %v527
      %529 = vrot.lane.b32.xlu0 %v525, 127
      %v530 = vpop.permute.xlu0 %529
      %v531 = vsel %vm442, 0.0, %v530
      %s532 = scalar_lea.vmem %s3, 24
      %v533 = vld [vmem:[%s532] sm:$0xf]
      %535 = vset.pattern.permute.xlu0 0
      %536 = vperm.xlu0 %535, %v533
      %v537 = vpop.permute.xlu0 %536
      %v539 = vmul.f32 %v537, %v528
      %v540 = vadd.f32 %v514, %v539
      %s541 = scalar_lea.vmem %s3, 28
      %v542 = vld [vmem:[%s541] sm:$0xf]
      %544 = vset.pattern.permute.xlu0 0
      %545 = vperm.xlu0 %544, %v542
      %v546 = vpop.permute.xlu0 %545
      %v548 = vmul.f32 %v546, %v525
      %v549 = vadd.f32 %v540, %v548
      %s550 = scalar_lea.vmem %s3, 32
      %v551 = vld [vmem:[%s550] sm:$0xf]
      %553 = vset.pattern.permute.xlu0 0
      %554 = vperm.xlu0 %553, %v551
      %v555 = vpop.permute.xlu0 %554
      %v557 = vmul.f32 %v555, %v531
      %v558 = vadd.f32 %v549, %v557
      %v559 = vld [vmem:[%s4] sm:$0xf]
      %561 = vset.pattern.permute.xlu0 0
      %562 = vperm.xlu0 %561, %v559
      %v563 = vpop.permute.xlu0 %562
      %v565 = vmul.f32 %v558, %v563
      %v566 = vld [vmem:[%s5] sm:$0xf]
      %568 = vset.pattern.permute.xlu0 0
      %569 = vperm.xlu0 %568, %v566
      %v570 = vpop.permute.xlu0 %569
      %v572 = vadd.f32 %v565, %v570
      %v573 = vadd.f32 %v572, 3.0
      %v574 = vmax.f32 %v573, 0.0
      %v575 = vmin.f32 %v574, 6.0
      %v576 = vmul.f32 %v572, %v575
      %v577 = vmul.f32 %v576, 0.16666667
      %v578 = vld [vmem:[%s6] sm:$0xf]
      %580 = vset.pattern.permute.xlu0 0
      %581 = vperm.xlu0 %580, %v578
      %v582 = vpop.permute.xlu0 %581
      %v584 = vlaneseq
      %v585 = vshrl.u32 %v584, 7
      %v586 = vsub.s32 0, %v585
      %v587 = vrot.slane %v577, %v586
      %v588 = vmul.f32 %v582, %v587
      %589 = vset.pattern.permute.xlu0 1
      %590 = vperm.xlu0 %589, %v578
      %v591 = vpop.permute.xlu0 %590
      %v593 = vlaneseq
      %v594 = vshrl.u32 %v593, 7
      %v595 = vsub.s32 1, %v594
      %v596 = vrot.slane %v577, %v595
      %v597 = vmul.f32 %v591, %v596
      %v598 = vadd.f32 %v588, %v597
      %599 = vset.pattern.permute.xlu0 2
      %600 = vperm.xlu0 %599, %v578
      %v601 = vpop.permute.xlu0 %600
      %v603 = vlaneseq
      %v604 = vshrl.u32 %v603, 7
      %v605 = vsub.s32 2, %v604
      %v606 = vrot.slane %v577, %v605
      %v607 = vmul.f32 %v601, %v606
      %v608 = vadd.f32 %v598, %v607
      %609 = vset.pattern.permute.xlu0 3
      %610 = vperm.xlu0 %609, %v578
      %v611 = vpop.permute.xlu0 %610
      %v613 = vlaneseq
      %v614 = vshrl.u32 %v613, 7
      %v615 = vsub.s32 3, %v614
      %v616 = vrot.slane %v577, %v615
      %v617 = vmul.f32 %v611, %v616
      %v618 = vadd.f32 %v608, %v617
      %v619 = vld [vmem:[%s7] sm:$0xf]
      %621 = vset.pattern.permute.xlu0 0
      %622 = vperm.xlu0 %621, %v619
      %v623 = vpop.permute.xlu0 %622
      %v625 = vmul.f32 %v618, %v623
      %v626 = vld [vmem:[%s8] sm:$0xf]
      %628 = vset.pattern.permute.xlu0 0
      %629 = vperm.xlu0 %628, %v626
      %v630 = vpop.permute.xlu0 %629
      %v632 = vadd.f32 %v625, %v630
      %v633 = vadd.f32 %v632, 3.0
      %v634 = vmax.f32 %v633, 0.0
      %v635 = vmin.f32 %v634, 6.0
      %v636 = vmul.f32 %v632, %v635
      %v637 = vmul.f32 %v636, 0.16666667
      %v638 = vadd.f32 %v637, %v426
      %639 = vst [vmem:[%s425] sm:$0xf] %v638
      %p640 = scmp.lt.s32.totalorder %s24, 1
      %s641 = scalar_select %p640, %s24, 1
      %p642 = scmp.lt.s32.totalorder %s25, 1
      %s643 = scalar_select %p642, %s25, 1
      %s644 = smul.addr %s641, 2
      %s645 = sadd.s32 %s643, %s644
      %s646 = smul.addr %s645, 4
      %s647 = scalar_lea.vmem %s9, %s646
      // Predicated region
      $region57: #{res_bn_hs_dr_block.1} parent=55 // pred_check
        %p648 = pneg %p262
      $region58: #{res_bn_hs_dr_block.1} parent=55 // pred_check_branch
        %650 = sbr.rel (%p648) target = $region60
      $region59: #{res_bn_hs_dr_block.1} parent=55 // pred_region
        _
      $region60: #{res_bn_hs_dr_block.1} parent=55 // pred_fallthru
        _
    $region56: #{res_bn_hs_dr_block.1} parent=5 // pred_fallthru
      _
    %p651 = scmp.le.s32.totalorder 2, %s15
    // Predicated region
    $region61: #{res_bn_hs_dr_block.1} parent=5 // pred_check
      %p652 = pneg %p651
    $region62: #{res_bn_hs_dr_block.1} parent=5 // pred_check_branch
      %654 = sbr.rel (%p652) target = $region64
    $region63: #{res_bn_hs_dr_block.1} parent=5 // pred_region
      %s655 = ssub.s32 %s15, 2
      // Predicated region
      $region65: #{res_bn_hs_dr_block.1} parent=63 // pred_check
        %p656 = pneg %p268
      $region66: #{res_bn_hs_dr_block.1} parent=63 // pred_check_branch
        %658 = sbr.rel (%p656) target = $region68
      $region67: #{res_bn_hs_dr_block.1} parent=63 // pred_region
        %p659 = scmp.lt.s32.totalorder %s26, 1
        %s660 = scalar_select %p659, %s26, 1
        %p661 = scmp.lt.s32.totalorder %s27, 1
        %s662 = scalar_select %p661, %s27, 1
        %s663 = smul.addr %s660, 2
        %s664 = sadd.s32 %s662, %s663
        %s665 = smul.addr %s664, 4
        %s666 = scalar_lea.vmem %s9, %s665
      $region68: #{res_bn_hs_dr_block.1} parent=63 // pred_fallthru
        _
    $region64: #{res_bn_hs_dr_block.1} parent=5 // pred_fallthru
      _
  $region6: #{res_bn_hs_dr_block.1} parent=0 // loop_footer
    %s19 = sadd.s32 1, %s15
  $region7: #{res_bn_hs_dr_block.1} parent=0 // loop_footer_branch
    %14 = sbr.rel target = $region3
  $region8: #{res_bn_hs_dr_block.1} parent=0 // loop_exit
    _

</llo_original>
